<compile_context>
chip_gen: v5e
topology: v5e:2x2
jax: 0.10.0
libtpu: 0.0.40
codegen_flags: <defaults>
</compile_context>

<pallas_src>
import numpy as np

import jax
import jax.numpy as jnp
from jax.experimental import pallas as pl
from jax.experimental.pallas import tpu as pltpu


def _moving_avg_kernel(a_ref, x_ref, o_ref):
    # a_ref: (TOt, T)   banded averaging matrix tile (pad/stride/scale folded in)
    # x_ref: (Bt, T, TF) input block,  o_ref: (Bt, TOt, TF) output block.
    a = a_ref[...]
    for b in range(x_ref.shape[0]):          # Bt is small & static -> unrolled
        o_ref[b] = jnp.dot(
            a, x_ref[b], preferred_element_type=jnp.float32
        ).astype(o_ref.dtype)


def _build_avg_matrix(T, kernel_size, stride):
    """A[t, i] = (# of taps of output t hitting input row i) / k, with
    replicate padding folded in (padded pos p -> clip(p - pad, 0, T-1))."""
    pad = (kernel_size - 1) // 2
    T_pad = T + 2 * pad
    T_out = (T_pad - kernel_size) // stride + 1
    starts = np.arange(T_out) * stride
    p = starts[:, None] + np.arange(kernel_size)[None, :]   # padded positions
    src = np.clip(p - pad, 0, T - 1)                        # unpadded rows
    A = np.zeros((T_out, T), np.float32)
    rows = np.repeat(np.arange(T_out), kernel_size)
    np.add.at(A, (rows, src.ravel()), 1.0 / kernel_size)
    return A, T_out


def _vmem_capacity_bytes():
    try:
        return int(pltpu.get_tpu_info().vmem_capacity_bytes)
    except Exception:
        return 64 * 1024 * 1024  # v7x per-TensorCore worst case


def _largest_divisor_leq(n, cap):
    cap = int(max(1, min(n, cap)))
    for d in range(cap, 0, -1):
        if n % d == 0:
            return d
    return 1


def moving_avg(x, kernel_size, stride=1):
    """x: (B, T, F) array. Returns the (B, T_out, F) moving average (trend)."""
    B, T, F = x.shape
    A_np, T_out = _build_avg_matrix(T, kernel_size, stride)
    itemsize = jnp.dtype(x.dtype).itemsize

    # Generation-aware budgets (v5e/v6e: 128 MiB VMEM, v7x: 64 MiB per TC).
    vmem_cap = _vmem_capacity_bytes()
    io_budget = int(min(max(vmem_cap // 4, 8 << 20), 24 << 20))  # dbl-buf x+out
    a_budget = int(min(vmem_cap // 8, 8 << 20))                  # one A tile

    # Feed the MXU natively: bf16 x bf16 for bf16 inputs, else f32.
    # (bf16 A coefficients add ~0.4% rel. error -- acceptable for bf16 data.)
    # TODO(synk): band-tiled / bf16-A option for very long f32 sequences on
    # v5e (dense f32 A is MXU-heavy there); kept dense f32 for accuracy.
    a_dtype = x.dtype if x.dtype == jnp.bfloat16 else jnp.float32
    a_itemsize = jnp.dtype(a_dtype).itemsize

    # --- feature axis: pad to a 128-multiple only when a full-F block would
    # not fit the VMEM budget (hardening + lane-dense tiling). Small F keeps
    # unpadded, HBM-contiguous full-F blocks (no extra HBM traffic).
    F_pad = F
    if F % 128 != 0 and 2 * (T + T_out) * F * itemsize > io_budget:
        F_pad = (-(-F // 128)) * 128
    x_in = x if F_pad == F else jnp.pad(x, ((0, 0), (0, 0), (0, F_pad - F)))

    # --- T_out tiling: bound the resident A tile (A is O(T_out * T)).
    TOt = T_out
    if T_out * T * a_itemsize > a_budget and T_out % 8 == 0:
        cap8 = max(1, a_budget // (T * a_itemsize * 8))
        TOt = 8 * _largest_divisor_leq(T_out // 8, cap8)

    # --- feature tiling (128-multiple divisors of F_pad, within budget).
    TF = F_pad
    if F_pad % 128 == 0:
        while TF > 128 and 2 * (T + TOt) * TF * itemsize > io_budget:
            TF = 128 * _largest_divisor_leq(F_pad // 128, (TF // 2) // 128)

    # --- batch blocking: pack batches per grid step when blocks cover the
    # full feature dim (HBM-contiguous); enlarges DMAs, amortises overhead.
    Bt = 1
    if TF == F_pad:
        per_b = 2 * (T + TOt) * TF * itemsize
        Bt = _largest_divisor_leq(B, min(32, max(1, io_budget // max(per_b, 1))))
    # Keep >= 2 grid steps on a parallel axis so both v7x TCs get work.
    if Bt == B and B > 1 and (F_pad // TF) * (T_out // TOt) == 1:
        Bt = _largest_divisor_leq(B, B // 2)

    grid = (B // Bt, F_pad // TF, T_out // TOt)

    A = jnp.asarray(A_np, dtype=a_dtype)

    # Explicit, generation-aware VMEM limit with headroom (A counted as
    # double-buffered since the default pipeline allocates 2 buffers).
    need = (2 * TOt * T * a_itemsize
            + 2 * Bt * T * TF * itemsize
            + 2 * Bt * TOt * TF * itemsize)
    vmem_limit = int(min(max(need + (2 << 20), 16 << 20), int(vmem_cap * 0.9)))

    out = pl.pallas_call(
        _moving_avg_kernel,
        out_shape=jax.ShapeDtypeStruct((B, T_out, F_pad), x.dtype),
        grid_spec=pltpu.PrefetchScalarGridSpec(
            num_scalar_prefetch=0,
            grid=grid,
            in_specs=[
                pl.BlockSpec((TOt, T), lambda b, f, t: (t, 0)),        # A tile
                pl.BlockSpec((Bt, T, TF), lambda b, f, t: (b, 0, f)),  # x block
            ],
            out_specs=pl.BlockSpec((Bt, TOt, TF), lambda b, f, t: (b, t, f)),
        ),
        compiler_params=pltpu.CompilerParams(
            dimension_semantics=("parallel", "parallel", "arbitrary"),
            vmem_limit_bytes=vmem_limit,
        ),
    )(A, x_in)

    return out if F_pad == F else out[:, :, :F]


def _reference(x, kernel_size, stride):
    # Pure-JAX reference mirroring the PyTorch forward exactly.
    pad = (kernel_size - 1) // 2
    if pad > 0:
        front = jnp.repeat(x[:, 0:1, :], pad, axis=1)
        end = jnp.repeat(x[:, -1:, :], pad, axis=1)
        xp = jnp.concatenate([front, x, end], axis=1)
    else:
        xp = x
    T_pad = xp.shape[1]
    T_out = (T_pad - kernel_size) // stride + 1
    outs = []
    for t in range(T_out):
        outs.append(jnp.mean(xp[:, t * stride:t * stride + kernel_size, :], axis=1))
    return jnp.stack(outs, axis=1)


if __name__ == "__main__":
    key = jax.random.PRNGKey(0)

    # Primary config: moving_avg(kernel_size=5, stride=1) on (B, T, F)=(2,16,32)
    B, T, F = 2, 16, 32
    x = jax.random.normal(key, (B, T, F), dtype=jnp.float32)
    out = jax.block_until_ready(moving_avg(x, 5, 1))
    ref = _reference(x, 5, 1)
    assert out.shape == ref.shape, (out.shape, ref.shape)
    assert jnp.allclose(out, ref, atol=1e-5, rtol=1e-5), "mismatch (stride=1)"

    # stride > 1 (strided windows folded into A's rows).
    out2 = jax.block_until_ready(moving_avg(x, 5, 2))
    ref2 = _reference(x, 5, 2)
    assert out2.shape == ref2.shape, (out2.shape, ref2.shape)
    assert jnp.allclose(out2, ref2, atol=1e-5, rtol=1e-5), "mismatch (stride=2)"

    # Batch-blocked path (several batches per grid step, contiguous DMAs).
    x3 = jax.random.normal(jax.random.PRNGKey(1), (8, 24, 16), dtype=jnp.float32)
    out3 = jax.block_until_ready(moving_avg(x3, 5, 1))
    ref3 = _reference(x3, 5, 1)
    assert out3.shape == ref3.shape, (out3.shape, ref3.shape)
    assert jnp.allclose(out3, ref3, atol=1e-5, rtol=1e-5), "mismatch (batched)"

    print("KERNEL_OK")
</pallas_src>

<mosaic_0001>
module attributes {stable_mosaic.version = 11 : i64} {
  func.func @_moving_avg_kernel(%arg0: i32, %arg1: i32, %arg2: i32, %arg3: memref<16x16xf32, #tpu.memory_space<vmem>>, %arg4: memref<1x16x32xf32, #tpu.memory_space<vmem>>, %arg5: memref<1x16x32xf32, #tpu.memory_space<vmem>>) attributes {dimension_semantics = [#tpu.dimension_semantics<parallel>, #tpu.dimension_semantics<parallel>, #tpu.dimension_semantics<arbitrary>], iteration_bounds = array<i64: 2, 1, 1>, scalar_prefetch = 0 : i64, scratch_operands = 0 : i64, tpu.core_type = #tpu.core_type<tc>, window_params = [{transform_indices = @transform_0, window_bounds = array<i64: 16, 16>}, {transform_indices = @transform_1, window_bounds = array<i64: 1, 16, 32>}, {transform_indices = @transform_2, window_bounds = array<i64: 1, 16, 32>}]} {
    %c0 = arith.constant 0 : index
    %c0_0 = arith.constant 0 : index
    %0 = vector.load %arg3[%c0, %c0_0] : memref<16x16xf32, #tpu.memory_space<vmem>>, vector<16x16xf32>
    %c0_1 = arith.constant 0 : index
    %c0_2 = arith.constant 0 : index
    %c0_3 = arith.constant 0 : index
    %1 = vector.load %arg4[%c0_1, %c0_2, %c0_3] : memref<1x16x32xf32, #tpu.memory_space<vmem>>, vector<1x16x32xf32>
    %2 = vector.shape_cast %1 : vector<1x16x32xf32> to vector<16x32xf32>
    %cst = arith.constant dense<0.000000e+00> : vector<16x32xf32>
    %3 = tpu.matmul %0, %2, %cst {dimension_numbers = #tpu.dot_dimension_numbers<[1], [0], [0], [1], [0, 0, 1, 1], [], []>} : vector<16x16xf32>, vector<16x32xf32>, vector<16x32xf32> -> vector<16x32xf32>
    %c0_4 = arith.constant 0 : index
    %c0_5 = arith.constant 0 : index
    %c0_6 = arith.constant 0 : index
    %4 = vector.load %arg5[%c0_4, %c0_5, %c0_6] : memref<1x16x32xf32, #tpu.memory_space<vmem>>, vector<1x16x32xf32>
    %5 = vector.shape_cast %4 : vector<1x16x32xf32> to vector<16x32xf32>
    %6 = vector.shape_cast %3 : vector<16x32xf32> to vector<1x16x32xf32>
    tpu.vector_store %arg5[%c0_4, %c0_5, %c0_6], %6 {strides = array<i32>} : memref<1x16x32xf32, #tpu.memory_space<vmem>>, vector<1x16x32xf32>,
    return
  }
  func.func @transform_0(%arg0: i32, %arg1: i32, %arg2: i32) -> (i32, i32) {
    %c0_i32 = arith.constant 0 : i32
    %c0_i32_0 = arith.constant 0 : i32
    return %arg2, %c0_i32 : i32, i32
  }
  func.func @transform_1(%arg0: i32, %arg1: i32, %arg2: i32) -> (i32, i32, i32) {
    %c0_i32 = arith.constant 0 : i32
    %c0_i32_0 = arith.constant 0 : i32
    return %arg0, %c0_i32, %arg1 : i32, i32, i32
  }
  func.func @transform_2(%arg0: i32, %arg1: i32, %arg2: i32) -> (i32, i32, i32) {
    %c0_i32 = arith.constant 0 : i32
    return %arg0, %arg2, %arg1 : i32, i32, i32
  }
}

</mosaic_0001>

<llo_original>
// kernel: tpu_custom_call.1
$region0: #{tpu_custom_call.1}
  #allocation0 [shape = 'u32[]', space=smem, size = 0x4, offset = 0x4, fixed_abs, tag = 'smem constant byte address 0x4 - core index']
  #allocation1 [shape = 'u32[72,128]{1,0:T(1,128)}', space=vmem, size = 0x9000, scoped, tag = 'internal scratch']
  %s0 = inlined_call_operand.hbm [shape: f32[16,16], index: 0, kind: input, shape index: {}]
  %s1 = inlined_call_operand.hbm [shape: f32[2,16,32], index: 1, kind: input, shape index: {}]
  %s2 = inlined_call_operand.hbm [shape: f32[2,16,32], index: 2, kind: output, shape index: {}]
  %s3 = sld [smem:[#allocation0]]
  $region49: #{tpu_custom_call.1} parent=0
    _
  %s5 = ssub.s32 1, %s3
  %s6 = scalar_select 0, %s5, %s3
  $region1: #{tpu_custom_call.1} parent=0
    #allocation2 [shape = 'u8[8192]{0}', space=vmem, size = 0x2000, scoped, tag = 'input window, operand 0, single buffered']
    #allocation3 [shape = 's32[2]{0}', space=sflag, size = 0x8, scoped, tag = 'scoped memory for tpu_custom_call.1']
    #allocation4 [shape = 's32[2]{0}', space=sflag, size = 0x8, scoped, tag = 'scoped memory for tpu_custom_call.1']
    #allocation5 [shape = 'u8[16384]{0}', space=vmem, size = 0x4000, scoped, tag = 'input window, operand 1']
    #allocation6 [shape = 's32[2]{0}', space=sflag, size = 0x8, scoped, tag = 'scoped memory for tpu_custom_call.1']
    #allocation7 [shape = 'u8[16384]{0}', space=vmem, size = 0x4000, scoped, tag = 'output window, operand 0']
    %7 = vsyncpa [#allocation3], 0
    %8 = vsyncpa [#allocation6], 0
    %s9 = scalar_lea.sflag [#allocation6], 1
    %10 = vsyncpa %s9, 0
    %11 = vsyncpa [#allocation4], 0
    %s12 = scalar_lea.sflag [#allocation4], 1
    %13 = vsyncpa %s12, 0
    loop: start=0, step=1, limit=4
    $region2: #{tpu_custom_call.1} parent=1 // loop_pre_header
      _
    $region3: #{tpu_custom_call.1} parent=1 // loop_header
      %s15 = sphi 0, %s19
      %p16 = scmp.ge.s32.totalorder %s15, 4
      %s22 = sphi 0, %s41
      %s23 = sphi 0, %s37
      %s24 = sphi 0, %s33
      %s25 = sphi 0, %s22
      %s26 = sphi 0, %s23
      %s27 = sphi 0, %s24
      %s28 = sphi 0, %s25
      %s29 = sphi 0, %s26
      %s30 = sphi 0, %s27
      %s44 = sphi 0, %s46
      %s47 = sphi 0, %s44
      %s48 = sphi 0, %s47
      %s64 = sphi 0, %s48
      %s72 = sphi 0, %s74
      %s75 = sphi 0, %s72
      %s76 = sphi 0, %s75
      %s92 = sphi 0, %s76
      %s102 = sphi 0, %s104
      %s105 = sphi 0, %s102
      %s106 = sphi 0, %s105
      %s122 = sphi 0, %s106
    $region4: #{tpu_custom_call.1} parent=1 // loop_header_branch
      %18 = sbr.rel (%p16) target = $region8
    $region5: #{tpu_custom_call.1} parent=1 // loop_body
      %s20 = ssub.s32 %s15, 1
      %s21 = ssub.s32 %s15, 2
      %s31 = sadd.s32 1, %s24
      %p32 = scmp.ge.s32.totalorder %s31, 1
      %s33 = scalar_select %p32, 0, %s31
      %s34 = sadd.s32 1, %s23
      %s35 = scalar_select %p32, %s34, %s23
      %p36 = scmp.ge.s32.totalorder %s35, 1
      %s37 = scalar_select %p36, 0, %s35
      %s38 = sadd.s32 1, %s22
      %s39 = scalar_select %p36, %s38, %s22
      %p40 = scmp.ge.s32.totalorder %s39, 2
      %s41 = scalar_select %p40, 0, %s39
      %s42 = ssub.s32 %s24, %s33
      %p43 = scmp.eq.s32.totalorder %s42, 0
      %s45 = sadd.s32 %s44, 1
      %s46 = scalar_select %p43, %s44, %s45
      %p49 = pneg %p43
      %p50 = scmp.eq.s32.totalorder %s15, 1
      %p51 = por %p49, %p50
      %p52 = scmp.ne.s32.totalorder %s44, %s47
      %p53 = scmp.eq.s32.totalorder %s15, 0
      %p54 = por %p52, %p53
      %p55 = scmp.ne.s32.totalorder %s44, %s47
      %p56 = scmp.eq.s32.totalorder %s20, 1
      %p57 = por %p55, %p56
      %p58 = scmp.ne.s32.totalorder %s47, %s48
      %p59 = scmp.eq.s32.totalorder %s20, 0
      %p60 = por %p58, %p59
      %p61 = scmp.ne.s32.totalorder %s47, %s48
      %p62 = scmp.eq.s32.totalorder %s21, 1
      %p63 = por %p61, %p62
      %p65 = scmp.ne.s32.totalorder %s48, %s64
      %p66 = scmp.eq.s32.totalorder %s21, 0
      %p67 = por %p65, %p66
      %s68 = ssub.s32 %s22, %s41
      %s69 = ssub.s32 %s23, %s37
      %s70 = sor.u32 %s68, %s69
      %p71 = scmp.eq.s32.totalorder %s70, 0
      %s73 = sadd.s32 %s72, 1
      %s74 = scalar_select %p71, %s72, %s73
      %p77 = pneg %p71
      %p78 = scmp.eq.s32.totalorder %s15, 1
      %p79 = por %p77, %p78
      %p80 = scmp.ne.s32.totalorder %s72, %s75
      %p81 = scmp.eq.s32.totalorder %s15, 0
      %p82 = por %p80, %p81
      %p83 = scmp.ne.s32.totalorder %s72, %s75
      %p84 = scmp.eq.s32.totalorder %s20, 1
      %p85 = por %p83, %p84
      %p86 = scmp.ne.s32.totalorder %s75, %s76
      %p87 = scmp.eq.s32.totalorder %s20, 0
      %p88 = por %p86, %p87
      %p89 = scmp.ne.s32.totalorder %s75, %s76
      %p90 = scmp.eq.s32.totalorder %s21, 1
      %p91 = por %p89, %p90
      %p93 = scmp.ne.s32.totalorder %s76, %s92
      %p94 = scmp.eq.s32.totalorder %s21, 0
      %p95 = por %p93, %p94
      %s96 = ssub.s32 %s22, %s41
      %s97 = ssub.s32 %s24, %s33
      %s98 = sor.u32 %s96, %s97
      %s99 = ssub.s32 %s23, %s37
      %s100 = sor.u32 %s98, %s99
      %p101 = scmp.eq.s32.totalorder %s100, 0
      %s103 = sadd.s32 %s102, 1
      %s104 = scalar_select %p101, %s102, %s103
      %p107 = pneg %p101
      %p108 = scmp.eq.s32.totalorder %s15, 1
      %p109 = por %p107, %p108
      %p110 = scmp.ne.s32.totalorder %s102, %s105
      %p111 = scmp.eq.s32.totalorder %s15, 0
      %p112 = por %p110, %p111
      %p113 = scmp.ne.s32.totalorder %s102, %s105
      %p114 = scmp.eq.s32.totalorder %s20, 1
      %p115 = por %p113, %p114
      %p116 = scmp.ne.s32.totalorder %s105, %s106
      %p117 = scmp.eq.s32.totalorder %s20, 0
      %p118 = por %p116, %p117
      %p119 = scmp.ne.s32.totalorder %s105, %s106
      %p120 = scmp.eq.s32.totalorder %s21, 1
      %p121 = por %p119, %p120
      %p123 = scmp.ne.s32.totalorder %s106, %s122
      %p124 = scmp.eq.s32.totalorder %s21, 0
      %p125 = por %p123, %p124
      %p126 = scmp.le.s32.totalorder 1, %s15
      %p127 = scmp.lt.s32.totalorder %s15, 3
      %p128 = pnand %p126, %p127
      %p129 = pneg %p128
      // Predicated region
      $region9: #{tpu_custom_call.1} parent=5 // pred_check
        _
      $region10: #{tpu_custom_call.1} parent=5 // pred_check_branch
        %131 = sbr.rel (%p128) target = $region12
      $region11: #{tpu_custom_call.1} parent=5 // pred_region
        %s132 = ssub.s32 %s15, 1
        // Predicated region
        $region13: #{tpu_custom_call.1} parent=11 // pred_check
          %p133 = pneg %p60
        $region14: #{tpu_custom_call.1} parent=11 // pred_check_branch
          %135 = sbr.rel (%p133) target = $region16
        $region15: #{tpu_custom_call.1} parent=11 // pred_region
          %s136 = smul.u32 2, %s27
          %138 = vsyncadd [#allocation3], 0
          %s139 = smul.addr %s136, 8
          %s140 = scalar_lea.hbm %s0, %s139
          %s141 = sshll.u32 %s140, 4
          %s142 = int_to_ptr.hbm [resolvable:$true] %s141
          %s143 = sshll.u32 [#allocation2], 4
          %s144 = int_to_ptr.vmem [resolvable:$true] %s143
          %149 = dma.hbm_to_vmem [thread:$0]  %s142, 256, %s144, [#allocation3], 128, 128, 8
        $region16: #{tpu_custom_call.1} parent=11 // pred_fallthru
          _
      $region12: #{tpu_custom_call.1} parent=5 // pred_fallthru
        _
      %p150 = scmp.lt.s32.totalorder %s15, 2
      // Predicated region
      $region17: #{tpu_custom_call.1} parent=5 // pred_check
        %p151 = pneg %p150
      $region18: #{tpu_custom_call.1} parent=5 // pred_check_branch
        %153 = sbr.rel (%p151) target = $region20
      $region19: #{tpu_custom_call.1} parent=5 // pred_region
        // Predicated region
        $region21: #{tpu_custom_call.1} parent=19 // pred_check
          %p154 = pneg %p82
        $region22: #{tpu_custom_call.1} parent=19 // pred_check_branch
          %156 = sbr.rel (%p154) target = $region24
        $region23: #{tpu_custom_call.1} parent=19 // pred_region
          %s157 = sand.u32 %s72, 1
          %s158 = scalar_lea.sflag [#allocation6], %s157
          %s159 = sand.u32 %s72, 1
          %s160 = smul.addr %s159, 16
          %s161 = scalar_lea.vmem [#allocation5], %s160
          %163 = vsyncadd %s158, 0
          %s164 = smul.addr %s22, 2
          %s165 = sadd.s32 %s23, %s164
          %s166 = smul.addr %s165, 8
          %s167 = scalar_lea.hbm %s1, %s166
          %s168 = sshll.u32 %s167, 4
          %s169 = int_to_ptr.hbm [resolvable:$true] %s168
          %s170 = sshll.u32 %s161, 4
          %s171 = int_to_ptr.vmem [resolvable:$true] %s170
          %176 = dma.hbm_to_vmem [thread:$0]  %s169, 256, %s171, %s158, 128, 128, 8
        $region24: #{tpu_custom_call.1} parent=19 // pred_fallthru
          _
      $region20: #{tpu_custom_call.1} parent=5 // pred_fallthru
        _
      %p177 = scmp.le.s32.totalorder 1, %s15
      %p178 = scmp.lt.s32.totalorder %s15, 3
      %p179 = pnand %p177, %p178
      %p180 = pneg %p179
      // Predicated region
      $region25: #{tpu_custom_call.1} parent=5 // pred_check
        _
      $region26: #{tpu_custom_call.1} parent=5 // pred_check_branch
        %182 = sbr.rel (%p179) target = $region28
      $region27: #{tpu_custom_call.1} parent=5 // pred_region
        %s183 = ssub.s32 %s15, 1
        // Predicated region
        $region29: #{tpu_custom_call.1} parent=27 // pred_check
          %p184 = pneg %p60
        $region30: #{tpu_custom_call.1} parent=27 // pred_check_branch
          %186 = sbr.rel (%p184) target = $region32
        $region31: #{tpu_custom_call.1} parent=27 // pred_region
          %188 = dma.done [#allocation3], 256
        $region32: #{tpu_custom_call.1} parent=27 // pred_fallthru
          _
        %s189 = sand.u32 %s75, 1
        %s190 = scalar_lea.sflag [#allocation6], %s189
        %s191 = sand.u32 %s75, 1
        %s192 = smul.addr %s191, 16
        %s193 = scalar_lea.vmem [#allocation5], %s192
        // Predicated region
        $region33: #{tpu_custom_call.1} parent=27 // pred_check
          %p194 = pneg %p88
        $region34: #{tpu_custom_call.1} parent=27 // pred_check_branch
          %196 = sbr.rel (%p194) target = $region36
        $region35: #{tpu_custom_call.1} parent=27 // pred_region
          %198 = dma.done %s190, 256
        $region36: #{tpu_custom_call.1} parent=27 // pred_fallthru
          _
        %p199 = pneg %p60
        %p200 = pneg %p57
        %s201 = sand.u32 %s75, 1
        %s202 = scalar_lea.sflag [#allocation6], %s201
        %s203 = sand.u32 %s75, 1
        %s204 = smul.addr %s203, 16
        %s205 = scalar_lea.vmem [#allocation5], %s204
        %p206 = pneg %p88
        %p207 = pneg %p85
        %p208 = pneg %p118
        %p209 = pneg %p115
        %s210 = sand.u32 %s105, 1
        %s211 = scalar_lea.sflag [#allocation4], %s210
        %s212 = sand.u32 %s105, 1
        %s213 = smul.addr %s212, 16
        %s214 = scalar_lea.vmem [#allocation7], %s213
        %s215 = smul.u32 2, %s27
        %s216 = smul.u32 2, %s27
        %v217 = vld [vmem:[#allocation2] sm:$0xff]
        %v218 = vld [vmem:[#allocation2 + $0x8] sm:$0xff]
        %v219 = vld [vmem:[%s193] sm:$0xff]
        %v220 = vld [vmem:[%s193 + $0x8] sm:$0xff]
        %vm221 = vcmask 130048
        %v223 = vsel %vm221, %v217, 0
        %v226 = vsel %vm221, %v218, 0
        %228 = vmatpush.msra.mxu0 0.0
        %229 = vmatpush.msra.mxu0 0.0
        %230 = vmatpush.msra.mxu0 0.0
        %231 = vmatpush.msra.mxu0 0.0
        %232 = vmatpush.msra.mxu0 0.0
        %233 = vmatpush.msra.mxu0 0.0
        %234 = vmatpush.msra.mxu0 0.0
        %235 = vmatpush.msra.mxu0 0.0
        %236 = vmatpush.msra.mxu0 0.0
        %237 = vmatpush.msra.mxu0 0.0
        %238 = vmatpush.msra.mxu0 0.0
        %239 = vmatpush.msra.mxu0 0.0
        %240 = vmatpush.msra.mxu0 0.0
        %241 = vmatpush.msra.mxu0 0.0
        %242 = vmatpush.msra.mxu0 %v220
        %243 = vmatpush.msra.mxu0 %v219
        %244 = vmatmul.f32.gmra.mxu0 %v223
        %v245 = vpop.f32.mrf.mxu0
        %v246 = vadd.f32 0.0, %v245
        %247 = vmatmul.f32.gmra.mxu0 %v226
        %v248 = vpop.f32.mrf.mxu0
        %v249 = vadd.f32 0.0, %v248
        %250 = vdwg.mxu0
        %vm251 = vcmask 261120
        %252 = vst.msk [vmem:[%s214] sm:$0xff] %vm251, %v246
        %253 = vst.msk [vmem:[%s214 + $0x8] sm:$0xff] %vm251, %v249
        %s254 = sand.u32 %s105, 1
        %s255 = scalar_lea.sflag [#allocation4], %s254
        %s256 = sand.u32 %s105, 1
        %s257 = smul.addr %s256, 16
        %s258 = scalar_lea.vmem [#allocation7], %s257
        // Predicated region
        $region37: #{tpu_custom_call.1} parent=27 // pred_check
          %p259 = pneg %p115
        $region38: #{tpu_custom_call.1} parent=27 // pred_check_branch
          %261 = sbr.rel (%p259) target = $region40
        $region39: #{tpu_custom_call.1} parent=27 // pred_region
          %s262 = smul.u32 2, %s27
          %264 = vsyncadd %s255, 0
          %s265 = sadd.s32 %s26, %s262
          %s266 = smul.addr %s25, 2
          %s267 = sadd.s32 %s265, %s266
          %s268 = smul.addr %s267, 8
          %s269 = scalar_lea.hbm %s2, %s268
          %s270 = sshll.u32 %s258, 4
          %s271 = int_to_ptr.vmem [resolvable:$true] %s270
          %s272 = sshll.u32 %s269, 4
          %s273 = int_to_ptr.hbm [resolvable:$true] %s272
          %278 = dma.vmem_to_hbm [thread:$0]  %s271, 256, %s273, %s255, 128, 128, 8
        $region40: #{tpu_custom_call.1} parent=27 // pred_fallthru
          _
      $region28: #{tpu_custom_call.1} parent=5 // pred_fallthru
        _
      %p279 = scmp.le.s32.totalorder 2, %s15
      // Predicated region
      $region41: #{tpu_custom_call.1} parent=5 // pred_check
        %p280 = pneg %p279
      $region42: #{tpu_custom_call.1} parent=5 // pred_check_branch
        %282 = sbr.rel (%p280) target = $region44
      $region43: #{tpu_custom_call.1} parent=5 // pred_region
        %s283 = ssub.s32 %s15, 2
        // Predicated region
        $region45: #{tpu_custom_call.1} parent=43 // pred_check
          %p284 = pneg %p121
        $region46: #{tpu_custom_call.1} parent=43 // pred_check_branch
          %286 = sbr.rel (%p284) target = $region48
        $region47: #{tpu_custom_call.1} parent=43 // pred_region
          %s287 = sand.u32 %s106, 1
          %s288 = scalar_lea.sflag [#allocation4], %s287
          %s289 = sand.u32 %s106, 1
          %s290 = smul.addr %s289, 16
          %s291 = scalar_lea.vmem [#allocation7], %s290
          %293 = dma.done %s288, 256
        $region48: #{tpu_custom_call.1} parent=43 // pred_fallthru
          _
      $region44: #{tpu_custom_call.1} parent=5 // pred_fallthru
        _
    $region6: #{tpu_custom_call.1} parent=1 // loop_footer
      %s19 = sadd.s32 1, %s15
    $region7: #{tpu_custom_call.1} parent=1 // loop_footer_branch
      %14 = sbr.rel target = $region3
    $region8: #{tpu_custom_call.1} parent=1 // loop_exit
      _
    %294 = vsyncpa [#allocation3], 1
    %s295 = scalar_lea.sflag [#allocation3], 1
    %296 = vsyncpa %s295, 1
    %297 = vsyncpa [#allocation6], 1
    %s298 = scalar_lea.sflag [#allocation6], 1
    %299 = vsyncpa %s298, 1
    %300 = vsyncpa [#allocation4], 1
    %s301 = scalar_lea.sflag [#allocation4], 1
    %302 = vsyncpa %s301, 1

</llo_original>
